<compile_context>
chip_gen: v7x
topology: tpu7x:2x2x1
jax: 0.10.0
libtpu: 0.0.40
codegen_flags: <defaults>
</compile_context>

<pallas_src>
import functools

import jax
import jax.numpy as jnp
from jax.experimental import pallas as pl
from jax.experimental.pallas import tpu as pltpu

DIM_IN = 1000
HIDDEN_SIZE = 100
DIM_OUT = 10

# Lane-dense padded shapes.
K_PAD = 1024   # DIM_IN  -> multiple of 128
H_PAD = 128    # HIDDEN  -> multiple of 128
N_PAD = 128    # DIM_OUT -> multiple of 128


def _round_up(n, m):
    return (n + m - 1) // m * m


def tiny_model_kernel(x_ref, w1_ref, b1_ref, w2_ref, b2_ref, o_ref):
    # layer1: (TB, K_PAD)bf16 @ (K_PAD, H_PAD)bf16 on the MXU, f32 accumulation.
    h = jnp.dot(x_ref[...], w1_ref[...], preferred_element_type=jnp.float32)
    # bias + ReLU on the VPU (f32).
    h = jnp.maximum(h + b1_ref[...], 0.0)
    # layer2: (TB, H_PAD) @ (H_PAD, N_PAD) fused in the same body (no HBM trip for h).
    out = jnp.dot(h.astype(w2_ref.dtype), w2_ref[...],
                  preferred_element_type=jnp.float32)
    out = out + b2_ref[...]
    o_ref[...] = out.astype(o_ref.dtype)   # lane-dense (TB, 128) store


@functools.partial(jax.jit, static_argnames=("block_b",))
def tiny_model_forward(x, w1, b1, w2, b2, *, block_b=512):
    """x: (B, DIM_IN); w1: (DIM_IN, HIDDEN); b1: (HIDDEN,) or (1, HIDDEN);
    w2: (HIDDEN, DIM_OUT); b2: (DIM_OUT,) or (1, DIM_OUT). Returns (B, DIM_OUT) f32."""
    B = x.shape[0]

    # Batch tile: multiple of 8 (sublane) and dividing the padded batch.
    tb = min(block_b, _round_up(B, 8))
    padded_b = _round_up(B, tb)

    # Host-side zero padding to lane-dense shapes (mathematically identical).
    xp = jnp.pad(x.astype(jnp.bfloat16),
                 ((0, padded_b - B), (0, K_PAD - DIM_IN)))
    w1p = jnp.pad(w1.astype(jnp.bfloat16),
                  ((0, K_PAD - DIM_IN), (0, H_PAD - HIDDEN_SIZE)))
    b1p = jnp.pad(b1.astype(jnp.float32).reshape(1, HIDDEN_SIZE),
                  ((0, 0), (0, H_PAD - HIDDEN_SIZE)))
    w2p = jnp.pad(w2.astype(jnp.bfloat16),
                  ((0, H_PAD - HIDDEN_SIZE), (0, N_PAD - DIM_OUT)))
    b2p = jnp.pad(b2.astype(jnp.float32).reshape(1, DIM_OUT),
                  ((0, 0), (0, N_PAD - DIM_OUT)))

    out_padded = pl.pallas_call(
        tiny_model_kernel,
        out_shape=jax.ShapeDtypeStruct((padded_b, N_PAD), jnp.float32),
        grid_spec=pltpu.PrefetchScalarGridSpec(
            num_scalar_prefetch=0,
            grid=(padded_b // tb,),
            in_specs=[
                pl.BlockSpec((tb, K_PAD), lambda i: (i, 0)),     # x tile (pipelined)
                pl.BlockSpec((K_PAD, H_PAD), lambda i: (0, 0)),  # W1 resident in VMEM
                pl.BlockSpec((1, H_PAD), lambda i: (0, 0)),      # b1 resident
                pl.BlockSpec((H_PAD, N_PAD), lambda i: (0, 0)),  # W2 resident
                pl.BlockSpec((1, N_PAD), lambda i: (0, 0)),      # b2 resident
            ],
            out_specs=pl.BlockSpec((tb, N_PAD), lambda i: (i, 0)),
        ),
        compiler_params=pltpu.CompilerParams(
            dimension_semantics=("parallel",),   # megacore sharding on v7x
        ),
    )(xp, w1p, b1p, w2p, b2p)

    return out_padded[:B, :DIM_OUT]


def init_params(key):
    # Deterministic init mimicking torch.nn.Linear default: U(-1/sqrt(fan_in), ...).
    k1, k2, k3, k4 = jax.random.split(key, 4)
    bound1 = 1.0 / jnp.sqrt(DIM_IN)
    bound2 = 1.0 / jnp.sqrt(HIDDEN_SIZE)
    w1 = jax.random.uniform(k1, (DIM_IN, HIDDEN_SIZE), jnp.float32, -bound1, bound1)
    b1 = jax.random.uniform(k2, (1, HIDDEN_SIZE), jnp.float32, -bound1, bound1)
    w2 = jax.random.uniform(k3, (HIDDEN_SIZE, DIM_OUT), jnp.float32, -bound2, bound2)
    b2 = jax.random.uniform(k4, (1, DIM_OUT), jnp.float32, -bound2, bound2)
    return w1, b1, w2, b2


if __name__ == "__main__":
    key = jax.random.PRNGKey(0)
    kx, kp = jax.random.split(key)
    batch = 8
    x = jax.random.normal(kx, (batch, DIM_IN), jnp.float32)
    w1, b1, w2, b2 = init_params(kp)

    out = tiny_model_forward(x, w1, b1, w2, b2)
    out = jax.block_until_ready(out)
    assert out.shape == (batch, DIM_OUT), out.shape

    # Pure-JAX f32 reference; kernel uses bf16 inputs with f32 accumulation,
    # so compare with a tolerance sized for bf16 rounding over K=1000.
    ref = jnp.maximum(x @ w1 + b1, 0.0) @ w2 + b2
    err = float(jnp.max(jnp.abs(out - ref)))
    assert jnp.allclose(out, ref, atol=3e-2, rtol=3e-2), f"max abs err {err}"

    print("KERNEL_OK")
</pallas_src>

<mosaic_0001>
module attributes {stable_mosaic.version = 11 : i64} {
  func.func @tiny_model_kernel(%arg0: i32, %arg1: memref<8x1024xbf16, #tpu.memory_space<vmem>>, %arg2: memref<1024x128xbf16, #tpu.memory_space<vmem>>, %arg3: memref<1x128xf32, #tpu.memory_space<vmem>>, %arg4: memref<128x128xbf16, #tpu.memory_space<vmem>>, %arg5: memref<1x128xf32, #tpu.memory_space<vmem>>, %arg6: memref<8x128xf32, #tpu.memory_space<vmem>>) attributes {dimension_semantics = [#tpu.dimension_semantics<parallel>], iteration_bounds = array<i64: 1>, scalar_prefetch = 0 : i64, scratch_operands = 0 : i64, tpu.core_type = #tpu.core_type<tc>, window_params = [{transform_indices = @transform_0, window_bounds = array<i64: 8, 1024>}, {pipeline_mode = #tpu.pipeline_mode<synchronous>, transform_indices = @transform_1, window_bounds = array<i64: 1024, 128>}, {pipeline_mode = #tpu.pipeline_mode<synchronous>, transform_indices = @transform_2, window_bounds = array<i64: 1, 128>}, {pipeline_mode = #tpu.pipeline_mode<synchronous>, transform_indices = @transform_3, window_bounds = array<i64: 128, 128>}, {pipeline_mode = #tpu.pipeline_mode<synchronous>, transform_indices = @transform_4, window_bounds = array<i64: 1, 128>}, {transform_indices = @transform_5, window_bounds = array<i64: 8, 128>}]} {
    %c0 = arith.constant 0 : index
    %c0_0 = arith.constant 0 : index
    %0 = vector.load %arg1[%c0, %c0_0] : memref<8x1024xbf16, #tpu.memory_space<vmem>>, vector<8x1024xbf16>
    %c0_1 = arith.constant 0 : index
    %c0_2 = arith.constant 0 : index
    %1 = vector.load %arg2[%c0_1, %c0_2] : memref<1024x128xbf16, #tpu.memory_space<vmem>>, vector<1024x128xbf16>
    %cst = arith.constant dense<0.000000e+00> : vector<8x128xf32>
    %2 = tpu.matmul %0, %1, %cst {dimension_numbers = #tpu.dot_dimension_numbers<[1], [0], [0], [1], [0, 0, 1, 1], [], []>} : vector<8x1024xbf16>, vector<1024x128xbf16>, vector<8x128xf32> -> vector<8x128xf32>
    %c0_3 = arith.constant 0 : index
    %c0_4 = arith.constant 0 : index
    %3 = vector.load %arg3[%c0_3, %c0_4] : memref<1x128xf32, #tpu.memory_space<vmem>>, vector<1x128xf32>
    %4 = vector.broadcast %3 : vector<1x128xf32> to vector<8x128xf32>
    %5 = arith.addf %2, %4 : vector<8x128xf32>
    %cst_5 = arith.constant 0.000000e+00 : f32
    %6 = vector.broadcast %cst_5 : f32 to vector<8x128xf32>
    %7 = arith.maximumf %5, %6 : vector<8x128xf32>
    %8 = arith.truncf %7 : vector<8x128xf32> to vector<8x128xbf16>
    %c0_6 = arith.constant 0 : index
    %c0_7 = arith.constant 0 : index
    %9 = vector.load %arg4[%c0_6, %c0_7] : memref<128x128xbf16, #tpu.memory_space<vmem>>, vector<128x128xbf16>
    %cst_8 = arith.constant dense<0.000000e+00> : vector<8x128xf32>
    %10 = tpu.matmul %8, %9, %cst_8 {dimension_numbers = #tpu.dot_dimension_numbers<[1], [0], [0], [1], [0, 0, 1, 1], [], []>} : vector<8x128xbf16>, vector<128x128xbf16>, vector<8x128xf32> -> vector<8x128xf32>
    %c0_9 = arith.constant 0 : index
    %c0_10 = arith.constant 0 : index
    %11 = vector.load %arg5[%c0_9, %c0_10] : memref<1x128xf32, #tpu.memory_space<vmem>>, vector<1x128xf32>
    %12 = vector.broadcast %11 : vector<1x128xf32> to vector<8x128xf32>
    %13 = arith.addf %10, %12 : vector<8x128xf32>
    %c0_11 = arith.constant 0 : index
    %c0_12 = arith.constant 0 : index
    %14 = vector.load %arg6[%c0_11, %c0_12] : memref<8x128xf32, #tpu.memory_space<vmem>>, vector<8x128xf32>
    tpu.vector_store %arg6[%c0_11, %c0_12], %13 {strides = array<i32>} : memref<8x128xf32, #tpu.memory_space<vmem>>, vector<8x128xf32>,
    return
  }
  func.func @transform_0(%arg0: i32) -> (i32, i32) {
    %c0_i32 = arith.constant 0 : i32
    %c0_i32_0 = arith.constant 0 : i32
    return %arg0, %c0_i32 : i32, i32
  }
  func.func @transform_1(%arg0: i32) -> (i32, i32) {
    %c0_i32 = arith.constant 0 : i32
    %c0_i32_0 = arith.constant 0 : i32
    %c0_i32_1 = arith.constant 0 : i32
    return %c0_i32, %c0_i32_0 : i32, i32
  }
  func.func @transform_2(%arg0: i32) -> (i32, i32) {
    %c0_i32 = arith.constant 0 : i32
    %c0_i32_0 = arith.constant 0 : i32
    %c0_i32_1 = arith.constant 0 : i32
    return %c0_i32, %c0_i32_0 : i32, i32
  }
  func.func @transform_3(%arg0: i32) -> (i32, i32) {
    %c0_i32 = arith.constant 0 : i32
    %c0_i32_0 = arith.constant 0 : i32
    %c0_i32_1 = arith.constant 0 : i32
    return %c0_i32, %c0_i32_0 : i32, i32
  }
  func.func @transform_4(%arg0: i32) -> (i32, i32) {
    %c0_i32 = arith.constant 0 : i32
    %c0_i32_0 = arith.constant 0 : i32
    %c0_i32_1 = arith.constant 0 : i32
    return %c0_i32, %c0_i32_0 : i32, i32
  }
  func.func @transform_5(%arg0: i32) -> (i32, i32) {
    %c0_i32 = arith.constant 0 : i32
    %c0_i32_0 = arith.constant 0 : i32
    return %arg0, %c0_i32 : i32, i32
  }
}

</mosaic_0001>

<llo_original>
// kernel: tiny_model_forward.1
$region0: #{tiny_model_forward.1}
  #allocation0 [shape = 'u32[]', space=smem, size = 0x4, offset = 0x4, fixed_abs, tag = 'smem constant byte address 0x4 - core index']
  #allocation1 [shape = 'u32[144,128]{1,0:T(1,128)}', space=vmem, size = 0x12000, scoped, tag = 'internal scratch']
  %s0 = inlined_call_operand.vmem [shape: bf16[8,1024], index: 0, kind: input, shape index: {}]
  %s1 = inlined_call_operand.vmem [shape: bf16[1024,128], index: 1, kind: input, shape index: {}]
  %s2 = inlined_call_operand.vmem [shape: f32[1,128], index: 2, kind: input, shape index: {}]
  %s3 = inlined_call_operand.vmem [shape: bf16[128,128], index: 3, kind: input, shape index: {}]
  %s4 = inlined_call_operand.vmem [shape: f32[1,128], index: 4, kind: input, shape index: {}]
  %s5 = inlined_call_operand.hbm [shape: f32[8,128], index: 5, kind: output, shape index: {}]
  %s6 = sld [smem:[#allocation0]]
  $region30: #{tiny_model_forward.1} parent=0
    _
  %s8 = ssub.s32 1, %s6
  %s9 = scalar_select 0, %s8, %s6
  $region1: #{tiny_model_forward.1} parent=0
    #allocation2 [shape = 'u8[4096]{0}', space=vmem, size = 0x1000, scoped, tag = 'output window, operand 0, single buffered']
    #allocation3 [shape = 's32[1]{0}', space=sflag, size = 0x4, scoped, tag = 'scoped memory for tiny_model_forward.1']
    %10 = vsyncpa [#allocation3], 0
    // Predicated region
    $region2: #{tiny_model_forward.1} parent=1 // pred_check
      _
    $region3: #{tiny_model_forward.1} parent=1 // pred_check_branch
      %12 = sbr.rel (0) target = $region5
    $region4: #{tiny_model_forward.1} parent=1 // pred_region
      _
    $region5: #{tiny_model_forward.1} parent=1 // pred_fallthru
      _
    // Predicated region
    $region6: #{tiny_model_forward.1} parent=1 // pred_check
      _
    $region7: #{tiny_model_forward.1} parent=1 // pred_check_branch
      %14 = sbr.rel (0) target = $region9
    $region8: #{tiny_model_forward.1} parent=1 // pred_region
      _
    $region9: #{tiny_model_forward.1} parent=1 // pred_fallthru
      _
    // Predicated region
    $region10: #{tiny_model_forward.1} parent=1 // pred_check
      _
    $region11: #{tiny_model_forward.1} parent=1 // pred_check_branch
      %16 = sbr.rel (0) target = $region13
    $region12: #{tiny_model_forward.1} parent=1 // pred_region
      _
    $region13: #{tiny_model_forward.1} parent=1 // pred_fallthru
      _
    // Predicated region
    $region14: #{tiny_model_forward.1} parent=1 // pred_check
      _
    $region15: #{tiny_model_forward.1} parent=1 // pred_check_branch
      %18 = sbr.rel (0) target = $region17
    $region16: #{tiny_model_forward.1} parent=1 // pred_region
      _
    $region17: #{tiny_model_forward.1} parent=1 // pred_fallthru
      _
    // Predicated region
    $region18: #{tiny_model_forward.1} parent=1 // pred_check
      _
    $region19: #{tiny_model_forward.1} parent=1 // pred_check_branch
      %20 = sbr.rel (0) target = $region21
    $region20: #{tiny_model_forward.1} parent=1 // pred_region
      _
    $region21: #{tiny_model_forward.1} parent=1 // pred_fallthru
      _
    %v22 = vld [vmem:[%s0] sm:$0xff]
    %v23 = vld [vmem:[%s0 + $0x8] sm:$0xff]
    %v24 = vld [vmem:[%s0 + $0x10] sm:$0xff]
    %v25 = vld [vmem:[%s0 + $0x18] sm:$0xff]
    %v26 = vld [vmem:[%s1] sm:$0xf]
    %v27 = vld [vmem:[%s1 + $0x4] sm:$0xf]
    %v28 = vld [vmem:[%s1 + $0x8] sm:$0xf]
    %v29 = vld [vmem:[%s1 + $0xc] sm:$0xf]
    %v30 = vld [vmem:[%s1 + $0x10] sm:$0xf]
    %v31 = vld [vmem:[%s1 + $0x14] sm:$0xf]
    %v32 = vld [vmem:[%s1 + $0x18] sm:$0xf]
    %v33 = vld [vmem:[%s1 + $0x1c] sm:$0xf]
    %v34 = vld [vmem:[%s1 + $0x20] sm:$0xf]
    %v35 = vld [vmem:[%s1 + $0x24] sm:$0xf]
    %v36 = vld [vmem:[%s1 + $0x28] sm:$0xf]
    %v37 = vld [vmem:[%s1 + $0x2c] sm:$0xf]
    %v38 = vld [vmem:[%s1 + $0x30] sm:$0xf]
    %v39 = vld [vmem:[%s1 + $0x34] sm:$0xf]
    %v40 = vld [vmem:[%s1 + $0x38] sm:$0xf]
    %v41 = vld [vmem:[%s1 + $0x3c] sm:$0xf]
    %v42 = vld [vmem:[%s1 + $0x40] sm:$0xf]
    %v43 = vld [vmem:[%s1 + $0x44] sm:$0xf]
    %v44 = vld [vmem:[%s1 + $0x48] sm:$0xf]
    %v45 = vld [vmem:[%s1 + $0x4c] sm:$0xf]
    %v46 = vld [vmem:[%s1 + $0x50] sm:$0xf]
    %v47 = vld [vmem:[%s1 + $0x54] sm:$0xf]
    %v48 = vld [vmem:[%s1 + $0x58] sm:$0xf]
    %v49 = vld [vmem:[%s1 + $0x5c] sm:$0xf]
    %v50 = vld [vmem:[%s1 + $0x60] sm:$0xf]
    %v51 = vld [vmem:[%s1 + $0x64] sm:$0xf]
    %v52 = vld [vmem:[%s1 + $0x68] sm:$0xf]
    %v53 = vld [vmem:[%s1 + $0x6c] sm:$0xf]
    %v54 = vld [vmem:[%s1 + $0x70] sm:$0xf]
    %v55 = vld [vmem:[%s1 + $0x74] sm:$0xf]
    %v56 = vld [vmem:[%s1 + $0x78] sm:$0xf]
    %v57 = vld [vmem:[%s1 + $0x7c] sm:$0xf]
    %v58 = vld [vmem:[%s1 + $0x80] sm:$0xf]
    %v59 = vld [vmem:[%s1 + $0x84] sm:$0xf]
    %v60 = vld [vmem:[%s1 + $0x88] sm:$0xf]
    %v61 = vld [vmem:[%s1 + $0x8c] sm:$0xf]
    %v62 = vld [vmem:[%s1 + $0x90] sm:$0xf]
    %v63 = vld [vmem:[%s1 + $0x94] sm:$0xf]
    %v64 = vld [vmem:[%s1 + $0x98] sm:$0xf]
    %v65 = vld [vmem:[%s1 + $0x9c] sm:$0xf]
    %v66 = vld [vmem:[%s1 + $0xa0] sm:$0xf]
    %v67 = vld [vmem:[%s1 + $0xa4] sm:$0xf]
    %v68 = vld [vmem:[%s1 + $0xa8] sm:$0xf]
    %v69 = vld [vmem:[%s1 + $0xac] sm:$0xf]
    %v70 = vld [vmem:[%s1 + $0xb0] sm:$0xf]
    %v71 = vld [vmem:[%s1 + $0xb4] sm:$0xf]
    %v72 = vld [vmem:[%s1 + $0xb8] sm:$0xf]
    %v73 = vld [vmem:[%s1 + $0xbc] sm:$0xf]
    %v74 = vld [vmem:[%s1 + $0xc0] sm:$0xf]
    %v75 = vld [vmem:[%s1 + $0xc4] sm:$0xf]
    %v76 = vld [vmem:[%s1 + $0xc8] sm:$0xf]
    %v77 = vld [vmem:[%s1 + $0xcc] sm:$0xf]
    %v78 = vld [vmem:[%s1 + $0xd0] sm:$0xf]
    %v79 = vld [vmem:[%s1 + $0xd4] sm:$0xf]
    %v80 = vld [vmem:[%s1 + $0xd8] sm:$0xf]
    %v81 = vld [vmem:[%s1 + $0xdc] sm:$0xf]
    %v82 = vld [vmem:[%s1 + $0xe0] sm:$0xf]
    %v83 = vld [vmem:[%s1 + $0xe4] sm:$0xf]
    %v84 = vld [vmem:[%s1 + $0xe8] sm:$0xf]
    %v85 = vld [vmem:[%s1 + $0xec] sm:$0xf]
    %v86 = vld [vmem:[%s1 + $0xf0] sm:$0xf]
    %v87 = vld [vmem:[%s1 + $0xf4] sm:$0xf]
    %v88 = vld [vmem:[%s1 + $0xf8] sm:$0xf]
    %v89 = vld [vmem:[%s1 + $0xfc] sm:$0xf]
    %v90 = vld [vmem:[%s1 + $0x100] sm:$0xf]
    %v91 = vld [vmem:[%s1 + $0x104] sm:$0xf]
    %v92 = vld [vmem:[%s1 + $0x108] sm:$0xf]
    %v93 = vld [vmem:[%s1 + $0x10c] sm:$0xf]
    %v94 = vld [vmem:[%s1 + $0x110] sm:$0xf]
    %v95 = vld [vmem:[%s1 + $0x114] sm:$0xf]
    %v96 = vld [vmem:[%s1 + $0x118] sm:$0xf]
    %v97 = vld [vmem:[%s1 + $0x11c] sm:$0xf]
    %v98 = vld [vmem:[%s1 + $0x120] sm:$0xf]
    %v99 = vld [vmem:[%s1 + $0x124] sm:$0xf]
    %v100 = vld [vmem:[%s1 + $0x128] sm:$0xf]
    %v101 = vld [vmem:[%s1 + $0x12c] sm:$0xf]
    %v102 = vld [vmem:[%s1 + $0x130] sm:$0xf]
    %v103 = vld [vmem:[%s1 + $0x134] sm:$0xf]
    %v104 = vld [vmem:[%s1 + $0x138] sm:$0xf]
    %v105 = vld [vmem:[%s1 + $0x13c] sm:$0xf]
    %v106 = vld [vmem:[%s1 + $0x140] sm:$0xf]
    %v107 = vld [vmem:[%s1 + $0x144] sm:$0xf]
    %v108 = vld [vmem:[%s1 + $0x148] sm:$0xf]
    %v109 = vld [vmem:[%s1 + $0x14c] sm:$0xf]
    %v110 = vld [vmem:[%s1 + $0x150] sm:$0xf]
    %v111 = vld [vmem:[%s1 + $0x154] sm:$0xf]
    %v112 = vld [vmem:[%s1 + $0x158] sm:$0xf]
    %v113 = vld [vmem:[%s1 + $0x15c] sm:$0xf]
    %v114 = vld [vmem:[%s1 + $0x160] sm:$0xf]
    %v115 = vld [vmem:[%s1 + $0x164] sm:$0xf]
    %v116 = vld [vmem:[%s1 + $0x168] sm:$0xf]
    %v117 = vld [vmem:[%s1 + $0x16c] sm:$0xf]
    %v118 = vld [vmem:[%s1 + $0x170] sm:$0xf]
    %v119 = vld [vmem:[%s1 + $0x174] sm:$0xf]
    %v120 = vld [vmem:[%s1 + $0x178] sm:$0xf]
    %v121 = vld [vmem:[%s1 + $0x17c] sm:$0xf]
    %v122 = vld [vmem:[%s1 + $0x180] sm:$0xf]
    %v123 = vld [vmem:[%s1 + $0x184] sm:$0xf]
    %v124 = vld [vmem:[%s1 + $0x188] sm:$0xf]
    %v125 = vld [vmem:[%s1 + $0x18c] sm:$0xf]
    %v126 = vld [vmem:[%s1 + $0x190] sm:$0xf]
    %v127 = vld [vmem:[%s1 + $0x194] sm:$0xf]
    %v128 = vld [vmem:[%s1 + $0x198] sm:$0xf]
    %v129 = vld [vmem:[%s1 + $0x19c] sm:$0xf]
    %v130 = vld [vmem:[%s1 + $0x1a0] sm:$0xf]
    %v131 = vld [vmem:[%s1 + $0x1a4] sm:$0xf]
    %v132 = vld [vmem:[%s1 + $0x1a8] sm:$0xf]
    %v133 = vld [vmem:[%s1 + $0x1ac] sm:$0xf]
    %v134 = vld [vmem:[%s1 + $0x1b0] sm:$0xf]
    %v135 = vld [vmem:[%s1 + $0x1b4] sm:$0xf]
    %v136 = vld [vmem:[%s1 + $0x1b8] sm:$0xf]
    %v137 = vld [vmem:[%s1 + $0x1bc] sm:$0xf]
    %v138 = vld [vmem:[%s1 + $0x1c0] sm:$0xf]
    %v139 = vld [vmem:[%s1 + $0x1c4] sm:$0xf]
    %v140 = vld [vmem:[%s1 + $0x1c8] sm:$0xf]
    %v141 = vld [vmem:[%s1 + $0x1cc] sm:$0xf]
    %v142 = vld [vmem:[%s1 + $0x1d0] sm:$0xf]
    %v143 = vld [vmem:[%s1 + $0x1d4] sm:$0xf]
    %v144 = vld [vmem:[%s1 + $0x1d8] sm:$0xf]
    %v145 = vld [vmem:[%s1 + $0x1dc] sm:$0xf]
    %v146 = vld [vmem:[%s1 + $0x1e0] sm:$0xf]
    %v147 = vld [vmem:[%s1 + $0x1e4] sm:$0xf]
    %v148 = vld [vmem:[%s1 + $0x1e8] sm:$0xf]
    %v149 = vld [vmem:[%s1 + $0x1ec] sm:$0xf]
    %v150 = vld [vmem:[%s1 + $0x1f0] sm:$0xf]
    %v151 = vld [vmem:[%s1 + $0x1f4] sm:$0xf]
    %v152 = vld [vmem:[%s1 + $0x1f8] sm:$0xf]
    %v153 = vld [vmem:[%s1 + $0x1fc] sm:$0xf]
    %v154 = vld [vmem:[%s2] sm:$0x1]
    %v156 = vlaneseq
    %v157 = vshrl.u32 %v156, 7
    %v158 = vsub.s32 0, %v157
    %v159 = vrot.slane %v154, %v158
    %v165 = vunpack.c.l.b16 %v22
    %v166 = vunpack.c.h.b16 %v22
    %v167 = vunpack.c.l.b16 %v23
    %v168 = vunpack.c.h.b16 %v23
    %v169 = vunpack.c.l.b16 %v24
    %v170 = vunpack.c.h.b16 %v24
    %v171 = vunpack.c.l.b16 %v25
    %v172 = vunpack.c.h.b16 %v25
    %v173 = vpack.c.b16 %v165, %v165
    %v174 = vpack.c.b16 %v166, %v166
    %v175 = vpack.c.b16 %v167, %v167
    %v176 = vpack.c.b16 %v168, %v168
    %v177 = vpack.c.b16 %v169, %v169
    %v178 = vpack.c.b16 %v170, %v170
    %v179 = vpack.c.b16 %v171, %v171
    %v180 = vpack.c.b16 %v172, %v172
    %v317 = vunpack.c.l.b16 %v26
    %v318 = vunpack.c.l.b16 %v27
    %v319 = vunpack.c.l.b16 %v28
    %v320 = vunpack.c.l.b16 %v29
    %v321 = vunpack.c.l.b16 %v30
    %v322 = vunpack.c.l.b16 %v31
    %v323 = vunpack.c.l.b16 %v32
    %v324 = vunpack.c.l.b16 %v33
    %v325 = vunpack.c.l.b16 %v34
    %v326 = vunpack.c.l.b16 %v35
    %v327 = vunpack.c.l.b16 %v36
    %v328 = vunpack.c.l.b16 %v37
    %v329 = vunpack.c.l.b16 %v38
    %v330 = vunpack.c.l.b16 %v39
    %v331 = vunpack.c.l.b16 %v40
    %v332 = vunpack.c.l.b16 %v41
    %v333 = vunpack.c.l.b16 %v42
    %v334 = vunpack.c.l.b16 %v43
    %v335 = vunpack.c.l.b16 %v44
    %v336 = vunpack.c.l.b16 %v45
    %v337 = vunpack.c.l.b16 %v46
    %v338 = vunpack.c.l.b16 %v47
    %v339 = vunpack.c.l.b16 %v48
    %v340 = vunpack.c.l.b16 %v49
    %v341 = vunpack.c.l.b16 %v50
    %v342 = vunpack.c.l.b16 %v51
    %v343 = vunpack.c.l.b16 %v52
    %v344 = vunpack.c.l.b16 %v53
    %v345 = vunpack.c.l.b16 %v54
    %v346 = vunpack.c.l.b16 %v55
    %v347 = vunpack.c.l.b16 %v56
    %v348 = vunpack.c.l.b16 %v57
    %v349 = vunpack.c.l.b16 %v58
    %v350 = vunpack.c.l.b16 %v59
    %v351 = vunpack.c.l.b16 %v60
    %v352 = vunpack.c.l.b16 %v61
    %v353 = vunpack.c.l.b16 %v62
    %v354 = vunpack.c.l.b16 %v63
    %v355 = vunpack.c.l.b16 %v64
    %v356 = vunpack.c.l.b16 %v65
    %v357 = vunpack.c.l.b16 %v66
    %v358 = vunpack.c.l.b16 %v67
    %v359 = vunpack.c.l.b16 %v68
    %v360 = vunpack.c.l.b16 %v69
    %v361 = vunpack.c.l.b16 %v70
    %v362 = vunpack.c.l.b16 %v71
    %v363 = vunpack.c.l.b16 %v72
    %v364 = vunpack.c.l.b16 %v73
    %v365 = vunpack.c.l.b16 %v74
    %v366 = vunpack.c.l.b16 %v75
    %v367 = vunpack.c.l.b16 %v76
    %v368 = vunpack.c.l.b16 %v77
    %v369 = vunpack.c.l.b16 %v78
    %v370 = vunpack.c.l.b16 %v79
    %v371 = vunpack.c.l.b16 %v80
    %v372 = vunpack.c.l.b16 %v81
    %v373 = vunpack.c.l.b16 %v82
    %v374 = vunpack.c.l.b16 %v83
    %v375 = vunpack.c.l.b16 %v84
    %v376 = vunpack.c.l.b16 %v85
    %v377 = vunpack.c.l.b16 %v86
    %v378 = vunpack.c.l.b16 %v87
    %v379 = vunpack.c.l.b16 %v88
    %v380 = vunpack.c.l.b16 %v89
    %v381 = vunpack.c.l.b16 %v90
    %v382 = vunpack.c.l.b16 %v91
    %v383 = vunpack.c.l.b16 %v92
    %v384 = vunpack.c.l.b16 %v93
    %v385 = vunpack.c.l.b16 %v94
    %v386 = vunpack.c.l.b16 %v95
    %v387 = vunpack.c.l.b16 %v96
    %v388 = vunpack.c.l.b16 %v97
    %v389 = vunpack.c.l.b16 %v98
    %v390 = vunpack.c.l.b16 %v99
    %v391 = vunpack.c.l.b16 %v100
    %v392 = vunpack.c.l.b16 %v101
    %v393 = vunpack.c.l.b16 %v102
    %v394 = vunpack.c.l.b16 %v103
    %v395 = vunpack.c.l.b16 %v104
    %v396 = vunpack.c.l.b16 %v105
    %v397 = vunpack.c.l.b16 %v106
    %v398 = vunpack.c.l.b16 %v107
    %v399 = vunpack.c.l.b16 %v108
    %v400 = vunpack.c.l.b16 %v109
    %v401 = vunpack.c.l.b16 %v110
    %v402 = vunpack.c.l.b16 %v111
    %v403 = vunpack.c.l.b16 %v112
    %v404 = vunpack.c.l.b16 %v113
    %v405 = vunpack.c.l.b16 %v114
    %v406 = vunpack.c.l.b16 %v115
    %v407 = vunpack.c.l.b16 %v116
    %v408 = vunpack.c.l.b16 %v117
    %v409 = vunpack.c.l.b16 %v118
    %v410 = vunpack.c.l.b16 %v119
    %v411 = vunpack.c.l.b16 %v120
    %v412 = vunpack.c.l.b16 %v121
    %v413 = vunpack.c.l.b16 %v122
    %v414 = vunpack.c.l.b16 %v123
    %v415 = vunpack.c.l.b16 %v124
    %v416 = vunpack.c.l.b16 %v125
    %v417 = vunpack.c.l.b16 %v126
    %v418 = vunpack.c.l.b16 %v127
    %v419 = vunpack.c.l.b16 %v128
    %v420 = vunpack.c.l.b16 %v129
    %v421 = vunpack.c.l.b16 %v130
    %v422 = vunpack.c.l.b16 %v131
    %v423 = vunpack.c.l.b16 %v132
    %v424 = vunpack.c.l.b16 %v133
    %v425 = vunpack.c.l.b16 %v134
    %v426 = vunpack.c.l.b16 %v135
    %v427 = vunpack.c.l.b16 %v136
    %v428 = vunpack.c.l.b16 %v137
    %v429 = vunpack.c.l.b16 %v138
    %v430 = vunpack.c.l.b16 %v139
    %v431 = vunpack.c.l.b16 %v140
    %v432 = vunpack.c.l.b16 %v141
    %v433 = vunpack.c.l.b16 %v142
    %v434 = vunpack.c.l.b16 %v143
    %v435 = vunpack.c.l.b16 %v144
    %v436 = vunpack.c.l.b16 %v145
    %v437 = vunpack.c.l.b16 %v146
    %v438 = vunpack.c.l.b16 %v147
    %v439 = vunpack.c.l.b16 %v148
    %v440 = vunpack.c.l.b16 %v149
    %v441 = vunpack.c.l.b16 %v150
    %v442 = vunpack.c.l.b16 %v151
    %v443 = vunpack.c.l.b16 %v152
    %v444 = vunpack.c.l.b16 %v153
    %v445 = vpack.c.b16 %v318, %v317
    %v446 = vpack.c.b16 %v320, %v319
    %v447 = vpack.c.b16 %v322, %v321
    %v448 = vpack.c.b16 %v324, %v323
    %v449 = vpack.c.b16 %v326, %v325
    %v450 = vpack.c.b16 %v328, %v327
    %v451 = vpack.c.b16 %v330, %v329
    %v452 = vpack.c.b16 %v332, %v331
    %v453 = vpack.c.b16 %v334, %v333
    %v454 = vpack.c.b16 %v336, %v335
    %v455 = vpack.c.b16 %v338, %v337
    %v456 = vpack.c.b16 %v340, %v339
    %v457 = vpack.c.b16 %v342, %v341
    %v458 = vpack.c.b16 %v344, %v343
    %v459 = vpack.c.b16 %v346, %v345
    %v460 = vpack.c.b16 %v348, %v347
    %v461 = vpack.c.b16 %v350, %v349
    %v462 = vpack.c.b16 %v352, %v351
    %v463 = vpack.c.b16 %v354, %v353
    %v464 = vpack.c.b16 %v356, %v355
    %v465 = vpack.c.b16 %v358, %v357
    %v466 = vpack.c.b16 %v360, %v359
    %v467 = vpack.c.b16 %v362, %v361
    %v468 = vpack.c.b16 %v364, %v363
    %v469 = vpack.c.b16 %v366, %v365
    %v470 = vpack.c.b16 %v368, %v367
    %v471 = vpack.c.b16 %v370, %v369
    %v472 = vpack.c.b16 %v372, %v371
    %v473 = vpack.c.b16 %v374, %v373
    %v474 = vpack.c.b16 %v376, %v375
    %v475 = vpack.c.b16 %v378, %v377
    %v476 = vpack.c.b16 %v380, %v379
    %v477 = vpack.c.b16 %v382, %v381
    %v478 = vpack.c.b16 %v384, %v383
    %v479 = vpack.c.b16 %v386, %v385
    %v480 = vpack.c.b16 %v388, %v387
    %v481 = vpack.c.b16 %v390, %v389
    %v482 = vpack.c.b16 %v392, %v391
    %v483 = vpack.c.b16 %v394, %v393
    %v484 = vpack.c.b16 %v396, %v395
    %v485 = vpack.c.b16 %v398, %v397
    %v486 = vpack.c.b16 %v400, %v399
    %v487 = vpack.c.b16 %v402, %v401
    %v488 = vpack.c.b16 %v404, %v403
    %v489 = vpack.c.b16 %v406, %v405
    %v490 = vpack.c.b16 %v408, %v407
    %v491 = vpack.c.b16 %v410, %v409
    %v492 = vpack.c.b16 %v412, %v411
    %v493 = vpack.c.b16 %v414, %v413
    %v494 = vpack.c.b16 %v416, %v415
    %v495 = vpack.c.b16 %v418, %v417
    %v496 = vpack.c.b16 %v420, %v419
    %v497 = vpack.c.b16 %v422, %v421
    %v498 = vpack.c.b16 %v424, %v423
    %v499 = vpack.c.b16 %v426, %v425
    %v500 = vpack.c.b16 %v428, %v427
    %v501 = vpack.c.b16 %v430, %v429
    %v502 = vpack.c.b16 %v432, %v431
    %v503 = vpack.c.b16 %v434, %v433
    %v504 = vpack.c.b16 %v436, %v435
    %v505 = vpack.c.b16 %v438, %v437
    %v506 = vpack.c.b16 %v440, %v439
    %v507 = vpack.c.b16 %v442, %v441
    %v508 = vpack.c.b16 %v444, %v443
    %573 = vmatprep.subr.bf16.mxu0 0
    %574 = vmatpush1.bf16.msra.mxu0 %v445
    %575 = vmatprep.subr.bf16.mxu0 0
    %576 = vmatpush1.bf16.msra.mxu0 %v446
    %577 = vmatprep.subr.bf16.mxu0 0
    %578 = vmatpush1.bf16.msra.mxu0 %v447
    %579 = vmatprep.subr.bf16.mxu0 0
    %580 = vmatpush1.bf16.msra.mxu0 %v448
    %581 = vmatprep.subr.bf16.mxu0 0
    %582 = vmatpush1.bf16.msra.mxu0 %v449
    %583 = vmatprep.subr.bf16.mxu0 0
    %584 = vmatpush1.bf16.msra.mxu0 %v450
    %585 = vmatprep.subr.bf16.mxu0 0
    %586 = vmatpush1.bf16.msra.mxu0 %v451
    %587 = vmatprep.subr.bf16.mxu0 0
    %588 = vmatpush1.bf16.msra.mxu0 %v452
    %589 = vmatprep.subr.bf16.mxu0 0
    %590 = vmatpush1.bf16.msra.mxu0 %v453
    %591 = vmatprep.subr.bf16.mxu0 0
    %592 = vmatpush1.bf16.msra.mxu0 %v454
    %593 = vmatprep.subr.bf16.mxu0 0
    %594 = vmatpush1.bf16.msra.mxu0 %v455
    %595 = vmatprep.subr.bf16.mxu0 0
    %596 = vmatpush1.bf16.msra.mxu0 %v456
    %597 = vmatprep.subr.bf16.mxu0 0
    %598 = vmatpush1.bf16.msra.mxu0 %v457
    %599 = vmatprep.subr.bf16.mxu0 0
    %600 = vmatpush1.bf16.msra.mxu0 %v458
    %601 = vmatprep.subr.bf16.mxu0 0
    %602 = vmatpush1.bf16.msra.mxu0 %v459
    %603 = vmatprep.subr.bf16.mxu0 0
    %604 = vmatpush1.bf16.msra.mxu0 %v460
    %605 = vmatprep.mubr.bf16.mxu0 %v174
    %606 = vmatmul.mubr.bf16.gmra.mrb[0].mxu0 %v173
    %v607 = vpop.f32.mrb[0].mxu0
    %v608 = vadd.f32 %v159, %v607
    %v609 = vpop.f32.mrb[0].mxu0
    %v610 = vpop.f32.mrb[0].mxu0
    %v611 = vpop.f32.mrb[0].mxu0
    %612 = vdwg.mxu0
    %613 = vmatprep.subr.bf16.mxu0 0
    %614 = vmatpush1.bf16.msra.mxu0 %v461
    %615 = vmatprep.subr.bf16.mxu0 0
    %616 = vmatpush1.bf16.msra.mxu0 %v462
    %617 = vmatprep.subr.bf16.mxu0 0
    %618 = vmatpush1.bf16.msra.mxu0 %v463
    %619 = vmatprep.subr.bf16.mxu0 0
    %620 = vmatpush1.bf16.msra.mxu0 %v464
    %621 = vmatprep.subr.bf16.mxu0 0
    %622 = vmatpush1.bf16.msra.mxu0 %v465
    %623 = vmatprep.subr.bf16.mxu0 0
    %624 = vmatpush1.bf16.msra.mxu0 %v466
    %625 = vmatprep.subr.bf16.mxu0 0
    %626 = vmatpush1.bf16.msra.mxu0 %v467
    %627 = vmatprep.subr.bf16.mxu0 0
    %628 = vmatpush1.bf16.msra.mxu0 %v468
    %629 = vmatprep.subr.bf16.mxu0 0
    %630 = vmatpush1.bf16.msra.mxu0 %v469
    %631 = vmatprep.subr.bf16.mxu0 0
    %632 = vmatpush1.bf16.msra.mxu0 %v470
    %633 = vmatprep.subr.bf16.mxu0 0
    %634 = vmatpush1.bf16.msra.mxu0 %v471
    %635 = vmatprep.subr.bf16.mxu0 0
    %636 = vmatpush1.bf16.msra.mxu0 %v472
    %637 = vmatprep.subr.bf16.mxu0 0
    %638 = vmatpush1.bf16.msra.mxu0 %v473
    %639 = vmatprep.subr.bf16.mxu0 0
    %640 = vmatpush1.bf16.msra.mxu0 %v474
    %641 = vmatprep.subr.bf16.mxu0 0
    %642 = vmatpush1.bf16.msra.mxu0 %v475
    %643 = vmatprep.subr.bf16.mxu0 0
    %644 = vmatpush1.bf16.msra.mxu0 %v476
    %645 = vmatprep.mubr.bf16.mxu0 %v176
    %646 = vmatmul.mubr.bf16.gmra.mrb[0].mxu0 %v175
    %v647 = vpop.f32.mrb[0].mxu0
    %v648 = vadd.f32 %v608, %v647
    %v649 = vpop.f32.mrb[0].mxu0
    %v650 = vpop.f32.mrb[0].mxu0
    %v651 = vpop.f32.mrb[0].mxu0
    %652 = vdwg.mxu0
    %653 = vmatprep.subr.bf16.mxu0 0
    %654 = vmatpush1.bf16.msra.mxu0 %v477
    %655 = vmatprep.subr.bf16.mxu0 0
    %656 = vmatpush1.bf16.msra.mxu0 %v478
    %657 = vmatprep.subr.bf16.mxu0 0
    %658 = vmatpush1.bf16.msra.mxu0 %v479
    %659 = vmatprep.subr.bf16.mxu0 0
    %660 = vmatpush1.bf16.msra.mxu0 %v480
    %661 = vmatprep.subr.bf16.mxu0 0
    %662 = vmatpush1.bf16.msra.mxu0 %v481
    %663 = vmatprep.subr.bf16.mxu0 0
    %664 = vmatpush1.bf16.msra.mxu0 %v482
    %665 = vmatprep.subr.bf16.mxu0 0
    %666 = vmatpush1.bf16.msra.mxu0 %v483
    %667 = vmatprep.subr.bf16.mxu0 0
    %668 = vmatpush1.bf16.msra.mxu0 %v484
    %669 = vmatprep.subr.bf16.mxu0 0
    %670 = vmatpush1.bf16.msra.mxu0 %v485
    %671 = vmatprep.subr.bf16.mxu0 0
    %672 = vmatpush1.bf16.msra.mxu0 %v486
    %673 = vmatprep.subr.bf16.mxu0 0
    %674 = vmatpush1.bf16.msra.mxu0 %v487
    %675 = vmatprep.subr.bf16.mxu0 0
    %676 = vmatpush1.bf16.msra.mxu0 %v488
    %677 = vmatprep.subr.bf16.mxu0 0
    %678 = vmatpush1.bf16.msra.mxu0 %v489
    %679 = vmatprep.subr.bf16.mxu0 0
    %680 = vmatpush1.bf16.msra.mxu0 %v490
    %681 = vmatprep.subr.bf16.mxu0 0
    %682 = vmatpush1.bf16.msra.mxu0 %v491
    %683 = vmatprep.subr.bf16.mxu0 0
    %684 = vmatpush1.bf16.msra.mxu0 %v492
    %685 = vmatprep.mubr.bf16.mxu0 %v178
    %686 = vmatmul.mubr.bf16.gmra.mrb[0].mxu0 %v177
    %v687 = vpop.f32.mrb[0].mxu0
    %v688 = vadd.f32 %v648, %v687
    %v689 = vpop.f32.mrb[0].mxu0
    %v690 = vpop.f32.mrb[0].mxu0
    %v691 = vpop.f32.mrb[0].mxu0
    %692 = vdwg.mxu0
    %693 = vmatprep.subr.bf16.mxu0 0
    %694 = vmatpush1.bf16.msra.mxu0 %v493
    %695 = vmatprep.subr.bf16.mxu0 0
    %696 = vmatpush1.bf16.msra.mxu0 %v494
    %697 = vmatprep.subr.bf16.mxu0 0
    %698 = vmatpush1.bf16.msra.mxu0 %v495
    %699 = vmatprep.subr.bf16.mxu0 0
    %700 = vmatpush1.bf16.msra.mxu0 %v496
    %701 = vmatprep.subr.bf16.mxu0 0
    %702 = vmatpush1.bf16.msra.mxu0 %v497
    %703 = vmatprep.subr.bf16.mxu0 0
    %704 = vmatpush1.bf16.msra.mxu0 %v498
    %705 = vmatprep.subr.bf16.mxu0 0
    %706 = vmatpush1.bf16.msra.mxu0 %v499
    %707 = vmatprep.subr.bf16.mxu0 0
    %708 = vmatpush1.bf16.msra.mxu0 %v500
    %709 = vmatprep.subr.bf16.mxu0 0
    %710 = vmatpush1.bf16.msra.mxu0 %v501
    %711 = vmatprep.subr.bf16.mxu0 0
    %712 = vmatpush1.bf16.msra.mxu0 %v502
    %713 = vmatprep.subr.bf16.mxu0 0
    %714 = vmatpush1.bf16.msra.mxu0 %v503
    %715 = vmatprep.subr.bf16.mxu0 0
    %716 = vmatpush1.bf16.msra.mxu0 %v504
    %717 = vmatprep.subr.bf16.mxu0 0
    %718 = vmatpush1.bf16.msra.mxu0 %v505
    %719 = vmatprep.subr.bf16.mxu0 0
    %720 = vmatpush1.bf16.msra.mxu0 %v506
    %721 = vmatprep.subr.bf16.mxu0 0
    %722 = vmatpush1.bf16.msra.mxu0 %v507
    %723 = vmatprep.subr.bf16.mxu0 0
    %724 = vmatpush1.bf16.msra.mxu0 %v508
    %725 = vmatprep.mubr.bf16.mxu0 %v180
    %726 = vmatmul.mubr.bf16.gmra.mrb[0].mxu0 %v179
    %v727 = vpop.f32.mrb[0].mxu0
    %v728 = vadd.f32 %v688, %v727
    %v729 = vpop.f32.mrb[0].mxu0
    %v730 = vpop.f32.mrb[0].mxu0
    %v731 = vpop.f32.mrb[0].mxu0
    %732 = vdwg.mxu0
    %v733 = vmax.f32 %v728, 0.0
    %v734 = vpack.c.bf16 %v733, %v733
    %v735 = vld [vmem:[%s3] sm:$0xf]
    %v736 = vld [vmem:[%s3 + $0x4] sm:$0xf]
    %v737 = vld [vmem:[%s3 + $0x8] sm:$0xf]
    %v738 = vld [vmem:[%s3 + $0xc] sm:$0xf]
    %v739 = vld [vmem:[%s3 + $0x10] sm:$0xf]
    %v740 = vld [vmem:[%s3 + $0x14] sm:$0xf]
    %v741 = vld [vmem:[%s3 + $0x18] sm:$0xf]
    %v742 = vld [vmem:[%s3 + $0x1c] sm:$0xf]
    %v743 = vld [vmem:[%s3 + $0x20] sm:$0xf]
    %v744 = vld [vmem:[%s3 + $0x24] sm:$0xf]
    %v745 = vld [vmem:[%s3 + $0x28] sm:$0xf]
    %v746 = vld [vmem:[%s3 + $0x2c] sm:$0xf]
    %v747 = vld [vmem:[%s3 + $0x30] sm:$0xf]
    %v748 = vld [vmem:[%s3 + $0x34] sm:$0xf]
    %v749 = vld [vmem:[%s3 + $0x38] sm:$0xf]
    %v750 = vld [vmem:[%s3 + $0x3c] sm:$0xf]
    %v751 = vld [vmem:[%s4] sm:$0x1]
    %v753 = vlaneseq
    %v754 = vshrl.u32 %v753, 7
    %v755 = vsub.s32 0, %v754
    %v756 = vrot.slane %v751, %v755
    %v774 = vunpack.c.l.b16 %v735
    %v775 = vunpack.c.l.b16 %v736
    %v776 = vunpack.c.l.b16 %v737
    %v777 = vunpack.c.l.b16 %v738
    %v778 = vunpack.c.l.b16 %v739
    %v779 = vunpack.c.l.b16 %v740
    %v780 = vunpack.c.l.b16 %v741
    %v781 = vunpack.c.l.b16 %v742
    %v782 = vunpack.c.l.b16 %v743
    %v783 = vunpack.c.l.b16 %v744
    %v784 = vunpack.c.l.b16 %v745
    %v785 = vunpack.c.l.b16 %v746
    %v786 = vunpack.c.l.b16 %v747
    %v787 = vunpack.c.l.b16 %v748
    %v788 = vunpack.c.l.b16 %v749
    %v789 = vunpack.c.l.b16 %v750
    %v790 = vpack.c.b16 %v775, %v774
    %v791 = vpack.c.b16 %v777, %v776
    %v792 = vpack.c.b16 %v779, %v778
    %v793 = vpack.c.b16 %v781, %v780
    %v794 = vpack.c.b16 %v783, %v782
    %v795 = vpack.c.b16 %v785, %v784
    %v796 = vpack.c.b16 %v787, %v786
    %v797 = vpack.c.b16 %v789, %v788
    %806 = vmatprep.subr.bf16.mxu0 0
    %807 = vmatpush1.bf16.msra.mxu0 %v790
    %808 = vmatprep.subr.bf16.mxu0 0
    %809 = vmatpush1.bf16.msra.mxu0 %v791
    %810 = vmatprep.subr.bf16.mxu0 0
    %811 = vmatpush1.bf16.msra.mxu0 %v792
    %812 = vmatprep.subr.bf16.mxu0 0
    %813 = vmatpush1.bf16.msra.mxu0 %v793
    %814 = vmatprep.subr.bf16.mxu0 0
    %815 = vmatpush1.bf16.msra.mxu0 %v794
    %816 = vmatprep.subr.bf16.mxu0 0
    %817 = vmatpush1.bf16.msra.mxu0 %v795
    %818 = vmatprep.subr.bf16.mxu0 0
    %819 = vmatpush1.bf16.msra.mxu0 %v796
    %820 = vmatprep.subr.bf16.mxu0 0
    %821 = vmatpush1.bf16.msra.mxu0 %v797
    %822 = vmatprep.subr.bf16.mxu0 0
    %823 = vmatpush1.bf16.msra.mxu0 0
    %824 = vmatprep.subr.bf16.mxu0 0
    %825 = vmatpush1.bf16.msra.mxu0 0
    %826 = vmatprep.subr.bf16.mxu0 0
    %827 = vmatpush1.bf16.msra.mxu0 0
    %828 = vmatprep.subr.bf16.mxu0 0
    %829 = vmatpush1.bf16.msra.mxu0 0
    %830 = vmatprep.subr.bf16.mxu0 0
    %831 = vmatpush1.bf16.msra.mxu0 0
    %832 = vmatprep.subr.bf16.mxu0 0
    %833 = vmatpush1.bf16.msra.mxu0 0
    %834 = vmatprep.subr.bf16.mxu0 0
    %835 = vmatpush1.bf16.msra.mxu0 0
    %836 = vmatprep.subr.bf16.mxu0 0
    %837 = vmatpush1.bf16.msra.mxu0 0
    %838 = vmatprep.mubr.bf16.mxu0 0
    %839 = vmatmul.mubr.bf16.gmra.mrb[0].mxu0 %v734
    %v840 = vpop.f32.mrb[0].mxu0
    %v841 = vadd.f32 %v756, %v840
    %v842 = vpop.f32.mrb[0].mxu0
    %v843 = vpop.f32.mrb[0].mxu0
    %v844 = vpop.f32.mrb[0].mxu0
    %845 = vdwg.mxu0
    %846 = vst [vmem:[#allocation2] sm:$0xff] %v841
    // Predicated region
    $region22: #{tiny_model_forward.1} parent=1 // pred_check
      _
    $region23: #{tiny_model_forward.1} parent=1 // pred_check_branch
      %848 = sbr.rel (0) target = $region25
    $region24: #{tiny_model_forward.1} parent=1 // pred_region
      %s850 = ssub.s32 128, 128
      %851 = vsyncadd [#allocation3], %s850
      %s853 = sshll.u32 [#allocation2], 4
      %s854 = int_to_ptr.vmem [resolvable:$true] %s853
      %856 = dma.vmem_to_hbm [thread:$0]  %s854, 128, %s5, [#allocation3]
    $region25: #{tiny_model_forward.1} parent=1 // pred_fallthru
      _
    // Predicated region
    $region26: #{tiny_model_forward.1} parent=1 // pred_check
      _
    $region27: #{tiny_model_forward.1} parent=1 // pred_check_branch
      %858 = sbr.rel (0) target = $region29
    $region28: #{tiny_model_forward.1} parent=1 // pred_region
      %859 = dma.done [#allocation3], 128
    $region29: #{tiny_model_forward.1} parent=1 // pred_fallthru
      _
    %860 = vsyncpa [#allocation3], 1

</llo_original>
